<compile_context>
chip_gen: v7x
topology: tpu7x:2x2x1
jax: 0.10.0
libtpu: 0.0.40
codegen_flags: <defaults>
</compile_context>

<pallas_src>
import functools

import jax
import jax.numpy as jnp
from jax.experimental import pallas as pl
from jax.experimental.pallas import tpu as pltpu


COLS = 128                 # lane width of the 2-D view (full vreg lane span)
ACC_ROWS = 512             # accumulator / chunk rows (256 KiB f32 scratch)
FAST_PATH_MAX_ROWS = 4096  # <= 2 MiB per input (f32): single-block kernel


def _cdiv(a, b):
    return -(-a // b)


def _device_config():
    """(n_partials, tile_rows, vmem_limit_bytes) tuned per TPU generation."""
    try:
        kind = jax.devices()[0].device_kind.lower()
    except Exception:
        kind = ""
    if "v7" in kind:                    # 2 TCs, 64 MiB VMEM (32 MiB scoped), ~3.2 TB/s HBM
        return 2, 8192, 32 * 1024 * 1024
    if "v6" in kind:                    # 1 TC, 128 MiB VMEM
        return 1, 8192, 64 * 1024 * 1024
    if "v5p" in kind or "v4" in kind:   # megacore parts: 2 TCs
        return 2, 8192, 64 * 1024 * 1024
    if "v5" in kind:                    # v5e: 1 TC, already HBM-bound at 2 MiB tiles
        return 1, 4096, 32 * 1024 * 1024
    return 1, 4096, 32 * 1024 * 1024


def _small_kernel(pred_ref, targ_ref, mu_ref, lv_ref, out_ref, *, n, batch, beta):
    """Single-block fast path: whole problem resident in VMEM, one reduce."""
    diff = pred_ref[...].astype(jnp.float32) - targ_ref[...].astype(jnp.float32)
    mse = jnp.sum(diff * diff) * (1.0 / float(n))
    mu = mu_ref[...].astype(jnp.float32)
    lv = lv_ref[...].astype(jnp.float32)
    kld = (-0.5 / float(batch)) * jnp.sum(1.0 + lv - mu * mu - jnp.exp(lv))
    kld_weight = 1.0
    out_ref[0, 0] = mse + float(beta) * kld_weight * kld


def _stream_kernel(pred_ref, targ_ref, mu_ref, lv_ref, out_ref, acc_ref, *,
                   rows, n, batch, beta, tiles_per_core, tile_rows):
    """Streaming reduction: grid = (n_partials, tiles_per_core)."""
    p = pl.program_id(0)   # partial index (one per TensorCore on 2-TC parts)
    i = pl.program_id(1)   # reduction step over streamed tiles

    @pl.when(i == 0)
    def _():
        acc_ref[...] = jnp.zeros_like(acc_ref)

    # Global (unclamped) row offset of this tile; used both for the ragged
    # tail mask and to zero out clamped duplicate tiles on the last core.
    start_row = (p * tiles_per_core + i) * tile_rows
    base_iota = jax.lax.broadcasted_iota(jnp.int32, (ACC_ROWS, COLS), 0)

    # Consume the tile in ACC_ROWS-row chunks: pure-VPU diff/square/select/add
    # into a small resident accumulator (keeps intermediates tiny and the
    # finalize reduce cheap).
    nchunks = tile_rows // ACC_ROWS
    for c in range(nchunks):
        lo = c * ACC_ROWS
        d = (pred_ref[lo:lo + ACC_ROWS, :].astype(jnp.float32)
             - targ_ref[lo:lo + ACC_ROWS, :].astype(jnp.float32))
        sq = d * d
        row_ids = base_iota + (start_row + lo)
        acc_ref[...] += jnp.where(row_ids < rows, sq, 0.0)

    @pl.when(i == tiles_per_core - 1)
    def _():
        # Single cross-lane/sublane reduce per partial.
        sse = jnp.sum(acc_ref[...])
        partial = sse * (1.0 / float(n))

        # KLD: mean_b(-0.5 * sum_latent(1 + lv - mu^2 - exp(lv))); added only
        # to partial 0 so the wrapper-side sum of partials is exact.
        mu = mu_ref[...].astype(jnp.float32)
        lv = lv_ref[...].astype(jnp.float32)
        kld = (-0.5 / float(batch)) * jnp.sum(1.0 + lv - mu * mu - jnp.exp(lv))
        kld_weight = 1.0
        is_first = (p == 0).astype(jnp.float32)
        out_ref[0, 0] = partial + is_first * (float(beta) * kld_weight * kld)


def beta_vae_loss(predict, target, mu, log_var, beta=1.0):
    """JAX/Pallas equivalent of BetaVAE_Loss.forward. Returns a scalar f32."""
    assert predict.shape[0] == target.shape[0]
    assert predict.shape == target.shape
    n = int(predict.size)
    batch = int(mu.shape[0])
    itemsize = jnp.dtype(predict.dtype).itemsize

    flat_p = predict.reshape(-1)
    flat_t = target.reshape(-1)
    if n % COLS:
        pad = COLS - n % COLS          # < 128 padded zeros; zero diff => no SSE contribution
        flat_p = jnp.pad(flat_p, (0, pad))
        flat_t = jnp.pad(flat_t, (0, pad))
    rows = _cdiv(n, COLS)
    pred2d = flat_p.reshape(rows, COLS)
    targ2d = flat_t.reshape(rows, COLS)

    flops = 3 * n + 4 * int(mu.size)
    transcendentals = int(mu.size)
    bytes_accessed = 2 * rows * COLS * itemsize + 2 * 4 * int(mu.size) + 8

    # ---- small-input fast path: one block, no grid/pipeline ----
    if rows <= FAST_PATH_MAX_ROWS:
        out = pl.pallas_call(
            functools.partial(_small_kernel, n=n, batch=batch, beta=float(beta)),
            out_shape=jax.ShapeDtypeStruct((1, 1), jnp.float32),
            in_specs=[pl.BlockSpec(memory_space=pltpu.VMEM)] * 4,
            out_specs=pl.BlockSpec(memory_space=pltpu.SMEM),
            compiler_params=pltpu.CompilerParams(
                vmem_limit_bytes=32 * 1024 * 1024),
            cost_estimate=pl.CostEstimate(
                flops=flops, transcendentals=transcendentals,
                bytes_accessed=bytes_accessed),
        )(pred2d, targ2d, mu, log_var)
        return out[0, 0]

    # ---- streaming path ----
    n_par, tile_rows, vmem_limit = _device_config()
    # Keep every block within the array's row extent (only the final grid
    # window may be partial); tile_rows stays a multiple of ACC_ROWS.
    tile_rows = min(tile_rows, (rows // ACC_ROWS) * ACC_ROWS)
    tiles_total = _cdiv(rows, tile_rows)
    if tiles_total < 2:
        n_par = 1
    tiles_per_core = _cdiv(tiles_total, n_par)

    def _tile_map(p, i):
        # Clamp so no block starts beyond the array; clamped duplicate tiles
        # are zeroed by the in-kernel row mask (which uses the UNclamped index).
        return (jnp.minimum(p * tiles_per_core + i, tiles_total - 1), 0)

    kernel = functools.partial(
        _stream_kernel, rows=rows, n=n, batch=batch, beta=float(beta),
        tiles_per_core=tiles_per_core, tile_rows=tile_rows)

    partials = pl.pallas_call(
        kernel,
        out_shape=jax.ShapeDtypeStruct((n_par, 1), jnp.float32),
        grid_spec=pltpu.PrefetchScalarGridSpec(
            num_scalar_prefetch=0,
            grid=(n_par, tiles_per_core),
            in_specs=[
                pl.BlockSpec((tile_rows, COLS), _tile_map),
                pl.BlockSpec((tile_rows, COLS), _tile_map),
                # mu / log_var: whole arrays, resident across the grid.
                pl.BlockSpec(mu.shape, lambda p, i: (0,) * mu.ndim),
                pl.BlockSpec(log_var.shape, lambda p, i: (0,) * log_var.ndim),
            ],
            out_specs=pl.BlockSpec((1, 1), lambda p, i: (p, 0),
                                   memory_space=pltpu.SMEM),
            scratch_shapes=[pltpu.VMEM((ACC_ROWS, COLS), jnp.float32)],
        ),
        compiler_params=pltpu.CompilerParams(
            dimension_semantics=("parallel", "arbitrary"),
            vmem_limit_bytes=vmem_limit),
        cost_estimate=pl.CostEstimate(
            flops=flops, transcendentals=transcendentals,
            bytes_accessed=bytes_accessed),
    )(pred2d, targ2d, mu, log_var)

    # Combine per-core partials (KLD was added only to partial 0).
    return jnp.sum(partials)


if __name__ == "__main__":
    key = jax.random.PRNGKey(0)
    k1, k2, k3, k4, k5, k6 = jax.random.split(key, 6)

    # Small shapes consistent with a VAE forward pass:
    # reconstructions/targets are images (NCHW), mu/log_var are latents.
    B, C, H, W = 2, 4, 16, 16
    LATENT = 32
    beta = 1.0

    predict = jax.random.normal(k1, (B, C, H, W), dtype=jnp.float32)
    target = jax.random.normal(k2, (B, C, H, W), dtype=jnp.float32)
    mu = jax.random.normal(k3, (B, LATENT), dtype=jnp.float32)
    log_var = 0.1 * jax.random.normal(k4, (B, LATENT), dtype=jnp.float32)

    def ref_loss(p, t, m, lv, b):
        mse = jnp.mean((p - t) ** 2)
        kld = jnp.mean(-0.5 * jnp.sum(1.0 + lv - m ** 2 - jnp.exp(lv), axis=1))
        return mse + b * 1.0 * kld

    # Fast (single-block) path.
    loss = jax.block_until_ready(
        beta_vae_loss(predict, target, mu, log_var, beta=beta))
    ref = ref_loss(predict, target, mu, log_var, beta)
    assert jnp.allclose(loss, ref, rtol=1e-5, atol=1e-5), (loss, ref)

    # Streaming (tiled, masked ragged tail) path.
    B2, C2, H2, W2 = 2, 4, 272, 272   # rows = 4624 > fast-path limit, partial last tile
    predict2 = jax.random.normal(k5, (B2, C2, H2, W2), dtype=jnp.float32)
    target2 = jax.random.normal(k6, (B2, C2, H2, W2), dtype=jnp.float32)
    loss2 = jax.block_until_ready(
        beta_vae_loss(predict2, target2, mu, log_var, beta=beta))
    ref2 = ref_loss(predict2, target2, mu, log_var, beta)
    assert jnp.allclose(loss2, ref2, rtol=1e-4, atol=1e-4), (loss2, ref2)

    print("KERNEL_OK")
</pallas_src>

<mosaic_0001>
module attributes {stable_mosaic.version = 11 : i64} {
  func.func @_small_kernel(%arg0: memref<16x128xf32, #tpu.memory_space<vmem>>, %arg1: memref<16x128xf32, #tpu.memory_space<vmem>>, %arg2: memref<2x32xf32, #tpu.memory_space<vmem>>, %arg3: memref<2x32xf32, #tpu.memory_space<vmem>>, %arg4: memref<1x1xf32, #tpu.memory_space<smem>>) attributes {dimension_semantics = [], scalar_prefetch = 0 : i64, scratch_operands = 0 : i64, tpu.core_type = #tpu.core_type<tc>} {
    %c0 = arith.constant 0 : index
    %c0_0 = arith.constant 0 : index
    %0 = vector.load %arg0[%c0, %c0_0] : memref<16x128xf32, #tpu.memory_space<vmem>>, vector<16x128xf32>
    %c0_1 = arith.constant 0 : index
    %c0_2 = arith.constant 0 : index
    %1 = vector.load %arg1[%c0_1, %c0_2] : memref<16x128xf32, #tpu.memory_space<vmem>>, vector<16x128xf32>
    %2 = arith.subf %0, %1 : vector<16x128xf32>
    %3 = arith.mulf %2, %2 : vector<16x128xf32>
    %4 = vector.shape_cast %3 : vector<16x128xf32> to vector<1x16x128xf32>
    %cst = arith.constant dense<0.000000e+00> : vector<1xf32>
    %5 = vector.multi_reduction <add>, %4, %cst [1, 2] : vector<1x16x128xf32> to vector<1xf32>
    %6 = vector.shape_cast %5 : vector<1xf32> to vector<1x1x1xf32>
    %7 = vector.extract %6[0, 0, 0] : f32 from vector<1x1x1xf32>
    %cst_3 = arith.constant 4.8828125E-4 : f32
    %8 = arith.mulf %7, %cst_3 : f32
    %c0_4 = arith.constant 0 : index
    %c0_5 = arith.constant 0 : index
    %9 = vector.load %arg2[%c0_4, %c0_5] : memref<2x32xf32, #tpu.memory_space<vmem>>, vector<2x32xf32>
    %c0_6 = arith.constant 0 : index
    %c0_7 = arith.constant 0 : index
    %10 = vector.load %arg3[%c0_6, %c0_7] : memref<2x32xf32, #tpu.memory_space<vmem>>, vector<2x32xf32>
    %cst_8 = arith.constant 1.000000e+00 : f32
    %11 = vector.broadcast %cst_8 : f32 to vector<2x32xf32>
    %12 = arith.addf %11, %10 : vector<2x32xf32>
    %13 = arith.mulf %9, %9 : vector<2x32xf32>
    %14 = arith.subf %12, %13 : vector<2x32xf32>
    %15 = math.exp %10 : vector<2x32xf32>
    %16 = arith.subf %14, %15 : vector<2x32xf32>
    %17 = vector.shape_cast %16 : vector<2x32xf32> to vector<1x2x32xf32>
    %cst_9 = arith.constant dense<0.000000e+00> : vector<1xf32>
    %18 = vector.multi_reduction <add>, %17, %cst_9 [1, 2] : vector<1x2x32xf32> to vector<1xf32>
    %19 = vector.shape_cast %18 : vector<1xf32> to vector<1x1x1xf32>
    %20 = vector.extract %19[0, 0, 0] : f32 from vector<1x1x1xf32>
    %cst_10 = arith.constant -2.500000e-01 : f32
    %21 = arith.mulf %cst_10, %20 : f32
    %cst_11 = arith.constant 1.000000e+00 : f32
    %22 = arith.mulf %cst_11, %21 : f32
    %23 = arith.addf %8, %22 : f32
    %c0_12 = arith.constant 0 : index
    %c0_13 = arith.constant 0 : index
    %24 = memref.load %arg4[%c0_12, %c0_13] : memref<1x1xf32, #tpu.memory_space<smem>>
    memref.store %23, %arg4[%c0_12, %c0_13] : memref<1x1xf32, #tpu.memory_space<smem>>
    return
  }
}

</mosaic_0001>

<llo_original>
// kernel: tpu_custom_call.1
$region0: #{tpu_custom_call.1}
  #allocation0 [shape = 'u32[]', space=smem, size = 0x4, offset = 0x4, fixed_abs, tag = 'smem constant byte address 0x4 - core index']
  #allocation1 [shape = 'u32[144,128]{1,0:T(1,128)}', space=vmem, size = 0x12000, scoped, tag = 'internal scratch']
  %s0 = inlined_call_operand.hbm [shape: f32[16,128], index: 0, kind: input, shape index: {}]
  %s1 = inlined_call_operand.hbm [shape: f32[16,128], index: 1, kind: input, shape index: {}]
  %s2 = inlined_call_operand.vmem [shape: f32[2,32], index: 2, kind: input, shape index: {}]
  %s3 = inlined_call_operand.vmem [shape: f32[2,32], index: 3, kind: input, shape index: {}]
  %s4 = inlined_call_operand.hbm [shape: f32[1,1], index: 4, kind: output, shape index: {}]
  %s5 = sld [smem:[#allocation0]]
  $region34: #{tpu_custom_call.1} parent=0
    _
  %s7 = ssub.s32 1, %s5
  %s8 = scalar_select 0, %s7, %s5
  $region1: #{tpu_custom_call.1} parent=0
    #allocation2 [shape = 'u8[8192]{0}', space=vmem, size = 0x2000, scoped, tag = 'input window, operand 0, single buffered']
    #allocation3 [shape = 's32[1]{0}', space=sflag, size = 0x4, scoped, tag = 'scoped memory for tpu_custom_call.1']
    #allocation4 [shape = 's32[1]{0}', space=sflag, size = 0x4, scoped, tag = 'scoped memory for tpu_custom_call.1']
    #allocation5 [shape = 'u8[8192]{0}', space=vmem, size = 0x2000, scoped, tag = 'input window, operand 1, single buffered']
    #allocation6 [shape = 's32[1]{0}', space=sflag, size = 0x4, scoped, tag = 'scoped memory for tpu_custom_call.1']
    #allocation7 [shape = 'u8[512]{0}', space=smem, size = 0x200, scoped, tag = 'output window, operand 0, single buffered']
    %9 = vsyncpa [#allocation3], 0
    %10 = vsyncpa [#allocation6], 0
    %11 = vsyncpa [#allocation4], 0
    // Predicated region
    $region2: #{tpu_custom_call.1} parent=1 // pred_check
      _
    $region3: #{tpu_custom_call.1} parent=1 // pred_check_branch
      %13 = sbr.rel (0) target = $region5
    $region4: #{tpu_custom_call.1} parent=1 // pred_region
      %s15 = ssub.s32 256, 256
      %16 = vsyncadd [#allocation3], %s15
      %s17 = sshll.u32 [#allocation2], 4
      %s18 = int_to_ptr.vmem [resolvable:$true] %s17
      %23 = dma.hbm_to_vmem [thread:$0]  %s0, 256, %s18, [#allocation3], 128, 128, 8
    $region5: #{tpu_custom_call.1} parent=1 // pred_fallthru
      _
    // Predicated region
    $region6: #{tpu_custom_call.1} parent=1 // pred_check
      _
    $region7: #{tpu_custom_call.1} parent=1 // pred_check_branch
      %25 = sbr.rel (0) target = $region9
    $region8: #{tpu_custom_call.1} parent=1 // pred_region
      %s27 = ssub.s32 256, 256
      %28 = vsyncadd [#allocation6], %s27
      %s29 = sshll.u32 [#allocation5], 4
      %s30 = int_to_ptr.vmem [resolvable:$true] %s29
      %35 = dma.hbm_to_vmem [thread:$0]  %s1, 256, %s30, [#allocation6], 128, 128, 8
    $region9: #{tpu_custom_call.1} parent=1 // pred_fallthru
      _
    // Predicated region
    $region10: #{tpu_custom_call.1} parent=1 // pred_check
      _
    $region11: #{tpu_custom_call.1} parent=1 // pred_check_branch
      %37 = sbr.rel (0) target = $region13
    $region12: #{tpu_custom_call.1} parent=1 // pred_region
      _
    $region13: #{tpu_custom_call.1} parent=1 // pred_fallthru
      _
    // Predicated region
    $region14: #{tpu_custom_call.1} parent=1 // pred_check
      _
    $region15: #{tpu_custom_call.1} parent=1 // pred_check_branch
      %39 = sbr.rel (0) target = $region17
    $region16: #{tpu_custom_call.1} parent=1 // pred_region
      _
    $region17: #{tpu_custom_call.1} parent=1 // pred_fallthru
      _
    // Predicated region
    $region18: #{tpu_custom_call.1} parent=1 // pred_check
      _
    $region19: #{tpu_custom_call.1} parent=1 // pred_check_branch
      %41 = sbr.rel (0) target = $region21
    $region20: #{tpu_custom_call.1} parent=1 // pred_region
      %42 = dma.done [#allocation3], 256
    $region21: #{tpu_custom_call.1} parent=1 // pred_fallthru
      _
    // Predicated region
    $region22: #{tpu_custom_call.1} parent=1 // pred_check
      _
    $region23: #{tpu_custom_call.1} parent=1 // pred_check_branch
      %44 = sbr.rel (0) target = $region25
    $region24: #{tpu_custom_call.1} parent=1 // pred_region
      %45 = dma.done [#allocation6], 256
    $region25: #{tpu_custom_call.1} parent=1 // pred_fallthru
      _
    %v46 = vld [vmem:[#allocation2] sm:$0xff]
    %v47 = vld [vmem:[#allocation2 + $0x8] sm:$0xff]
    %v48 = vld [vmem:[#allocation5] sm:$0xff]
    %v49 = vld [vmem:[#allocation5 + $0x8] sm:$0xff]
    %v50 = vsub.f32 %v46, %v48
    %v51 = vsub.f32 %v47, %v49
    %v52 = vmul.f32 %v50, %v50
    %v53 = vmul.f32 %v51, %v51
    %v54 = vadd.f32 %v52, %v53
    %55 = vadd.xlane.f32.xlu0 %v54
    %v56 = vpop.xlane.xlu0 %55
    %v57 = vrot.slane %v56, 4
    %v58 = vadd.f32 %v56, %v57
    %v59 = vrot.slane %v58, 2
    %v60 = vadd.f32 %v58, %v59
    %v61 = vrot.slane %v60, 1
    %v62 = vadd.f32 %v60, %v61
    %s63 = vtos %v62
    %s64 = smul.f32 %s63, 0.00048828125
    %v65 = vld [vmem:[%s2] sm:$0x3]
    %v66 = vld [vmem:[%s3] sm:$0x3]
    %v67 = vadd.f32 %v66, 1.0
    %v68 = vmul.f32 %v65, %v65
    %v69 = vsub.f32 %v67, %v68
    %v70 = vmul.f32 %v66, 1.442695
    %v71 = vpow.pop %v70
    %v72 = vsub.f32 %v69, %v71
    %vm73 = vcmask 254976
    %v74 = vsel %vm73, %v72, 0.0
    %75 = vadd.xlane.f32.xlu0 %v74
    %v76 = vpop.xlane.xlu0 %75
    %v77 = vrot.slane %v76, 4
    %v78 = vadd.f32 %v76, %v77
    %v79 = vrot.slane %v78, 2
    %v80 = vadd.f32 %v78, %v79
    %v81 = vrot.slane %v80, 1
    %v82 = vadd.f32 %v80, %v81
    %s83 = vtos %v82
    %s84 = smul.f32 %s83, -0.25
    %s85 = sadd.f32 %s64, %s84
    %s86 = scalar_lea.smem [#allocation7], 0
    %87 = sst [smem:[%s86]] %s85
    // Predicated region
    $region26: #{tpu_custom_call.1} parent=1 // pred_check
      _
    $region27: #{tpu_custom_call.1} parent=1 // pred_check_branch
      %89 = sbr.rel (0) target = $region29
    $region28: #{tpu_custom_call.1} parent=1 // pred_region
      %s91 = ssub.s32 16, 16
      %92 = vsyncadd [#allocation4], %s91
      %95 = dma.smem_to_hbm [#allocation7], 16, %s4, [#allocation4]
    $region29: #{tpu_custom_call.1} parent=1 // pred_fallthru
      _
    // Predicated region
    $region30: #{tpu_custom_call.1} parent=1 // pred_check
      _
    $region31: #{tpu_custom_call.1} parent=1 // pred_check_branch
      %97 = sbr.rel (0) target = $region33
    $region32: #{tpu_custom_call.1} parent=1 // pred_region
      %98 = dma.done [#allocation4], 16
    $region33: #{tpu_custom_call.1} parent=1 // pred_fallthru
      _
    %99 = sfence
    %100 = vsyncpa [#allocation3], 1
    %101 = vsyncpa [#allocation6], 1
    %102 = vsyncpa [#allocation4], 1

</llo_original>
